<compile_context>
chip_gen: v5e
topology: v5e:2x2
jax: 0.10.0
libtpu: 0.0.40
codegen_flags: <defaults>
</compile_context>

<pallas_src>
import functools

import jax
import jax.numpy as jnp
from jax.experimental import pallas as pl
from jax.experimental.pallas import tpu as pltpu

# ----- small synthetic config (stands in for AutoModel's config) -----
B = 2            # batch
L = 8            # padded sequence length
H = 32           # hidden size  (== get_query_embedding_dim())
F = 64           # FFN intermediate size
V = 100          # vocab size
NUM_LAYERS = 2
EPS = 1e-12
OUT_PAD = 128    # lane-dense packed output width: [mean | cls | pooler | zeros]


def _layer_norm(x, gamma, beta):
    """LayerNorm over the last (lane) dim; gamma/beta are (1, H), f32."""
    mu = jnp.mean(x, axis=-1, keepdims=True)
    var = jnp.mean((x - mu) ** 2, axis=-1, keepdims=True)
    return (x - mu) * jax.lax.rsqrt(var + EPS) * gamma + beta


def fused_encoder_kernel(x_ref, bias_ref, sel_ref,
                         w_attn_ref, w_f1_ref, w_f2_ref, vec_ref,
                         wp_ref, bp_ref,
                         out_ref):
    """Single invocation: all layers + pooling.  Everything VMEM-resident."""
    x0 = x_ref[...]                      # (B*L, H) f32 embeddings
    bias = bias_ref[...]                 # (B*L, B*L) f32 block-diag + key-pad bias

    def layer(l, x2d):
        w_attn = w_attn_ref[l]           # (H, 4H) bf16  [wq | wk | wv | wo]
        vp = vec_ref[l]                  # (3, 128) f32 packed biases / LN params
        b_qkv = vp[0:1, 0:3 * H]         # (1, 3H)
        b_o = vp[0:1, 3 * H:4 * H]       # (1, H)
        g1 = vp[1:2, 0:H]
        b1 = vp[1:2, H:2 * H]
        b_f1 = vp[1:2, 2 * H:2 * H + F]  # (1, F)
        b_f2 = vp[2:3, 0:H]
        g2 = vp[2:3, H:2 * H]
        b2 = vp[2:3, 2 * H:3 * H]

        # --- self attention (single head), fused QKV projection, flat 2-D ---
        x_bf = x2d.astype(jnp.bfloat16)
        qkv = jnp.dot(x_bf, w_attn[:, 0:3 * H],
                      preferred_element_type=jnp.float32) + b_qkv      # (B*L, 3H)
        q = qkv[:, 0:H]
        k = qkv[:, H:2 * H]
        v = qkv[:, 2 * H:3 * H]

        # single (B*L, B*L) score matmul; cross-batch & padded keys masked via bias
        scores = jnp.dot(q.astype(jnp.bfloat16), k.astype(jnp.bfloat16).T,
                         preferred_element_type=jnp.float32) * (H ** -0.5) + bias
        m = jnp.max(scores, axis=-1, keepdims=True)
        e = jnp.exp(scores - m)
        probs = e / jnp.sum(e, axis=-1, keepdims=True)   # exact division (parity)

        ctx = jnp.dot(probs.astype(jnp.bfloat16), v.astype(jnp.bfloat16),
                      preferred_element_type=jnp.float32)               # (B*L, H)
        attn_out = jnp.dot(ctx.astype(jnp.bfloat16), w_attn[:, 3 * H:4 * H],
                           preferred_element_type=jnp.float32) + b_o
        h1 = _layer_norm(x2d + attn_out, g1, b1)

        # --- feed forward (flat 2-D matmuls, bf16 operands, f32 accum) ---
        ff = jnp.dot(h1.astype(jnp.bfloat16), w_f1_ref[l],
                     preferred_element_type=jnp.float32) + b_f1
        ff = jax.nn.gelu(ff)
        ff = jnp.dot(ff.astype(jnp.bfloat16), w_f2_ref[l],
                     preferred_element_type=jnp.float32) + b_f2
        return _layer_norm(h1 + ff, g2, b2)

    h_final = jax.lax.fori_loop(0, NUM_LAYERS, layer, x0, unroll=True)  # (B*L, H)

    # --- pooling heads ---
    # sel: (2B, B*L); rows 0..B-1 = mean-pool weights (mask / clamp(sum mask)),
    #                 rows B..2B-1 = cls one-hot selectors.  f32 matmul for accuracy.
    pooled = jnp.dot(sel_ref[...], h_final,
                     preferred_element_type=jnp.float32)                # (2B, H)
    mean_p = pooled[0:B, :]
    cls = pooled[B:2 * B, :]
    pooler = jnp.tanh(jnp.dot(cls.astype(jnp.bfloat16), wp_ref[...],
                              preferred_element_type=jnp.float32) + bp_ref[...])

    pad = jnp.zeros((B, OUT_PAD - 3 * H), jnp.float32)
    out_ref[...] = jnp.concatenate([mean_p, cls, pooler, pad], axis=-1)  # (B, 128)


def init_params(key):
    """Deterministic synthetic weights; matmul weights stored bf16 (MXU-native)."""
    ks = iter(jax.random.split(key, 16))
    s = 0.02

    def nrm(shape, dtype=jnp.bfloat16):
        return (s * jax.random.normal(next(ks), shape, dtype=jnp.float32)).astype(dtype)

    # Per-layer attention weights packed [wq | wk | wv | wo] along lanes: (NL, H, 4H)
    w_attn = nrm((NUM_LAYERS, H, 4 * H))
    w_f1 = nrm((NUM_LAYERS, H, F))
    w_f2 = nrm((NUM_LAYERS, F, H))

    # Packed per-layer f32 vectors (NL, 3, 128):
    #   row 0: [bq | bk | bv | bo]   (zeros)
    #   row 1: [g1 | b1 | bf1]       (g1 = ones)
    #   row 2: [bf2 | g2 | b2 | pad] (g2 = ones)
    vec = jnp.zeros((NUM_LAYERS, 3, 128), jnp.float32)
    vec = vec.at[:, 1, 0:H].set(1.0)
    vec = vec.at[:, 2, H:2 * H].set(1.0)

    return {
        'word_emb': nrm((V, H), jnp.float32),
        'pos_emb': nrm((L, H), jnp.float32),
        'w_attn': w_attn,
        'w_f1': w_f1,
        'w_f2': w_f2,
        'vec': vec,
        'wp': nrm((H, H)),                       # pooler weight, bf16
        'bp': jnp.zeros((1, H), jnp.float32),    # pooler bias
    }


@functools.partial(jax.jit, static_argnames=('pooling_type',))
def query_encoder_forward(input_ids, attention_mask, params,
                          pooling_type='mean_pool'):
    # glue: embedding lookup + positional embeddings (tokenizer output assumed)
    x = params['word_emb'][input_ids] + params['pos_emb'][None, :, :]
    x2d = x.reshape(B * L, H).astype(jnp.float32)

    mask_f = attention_mask.astype(jnp.float32)                    # (B, L)
    mask_flat = mask_f.reshape(B * L)

    # additive attention bias (B*L, B*L): 0 for same-batch valid keys, -1e9 otherwise
    batch_id = jnp.arange(B * L, dtype=jnp.int32) // L
    same_batch = batch_id[:, None] == batch_id[None, :]
    valid_key = mask_flat[None, :] > 0.5
    attn_bias = jnp.where(same_batch & valid_key, 0.0, -1e9).astype(jnp.float32)

    # pooling selection matrix (2B, B*L)
    sum_mask = jnp.clip(jnp.sum(mask_f, axis=1, keepdims=True), 1e-9, None)   # clamp(min=1e-9)
    mean_w = mask_f / sum_mask                                                 # (B, L)
    eye_b = jnp.eye(B, dtype=jnp.float32)
    mean_rows = (eye_b[:, :, None] * mean_w[None, :, :]).reshape(B, B * L)
    cls_rows = jax.nn.one_hot(jnp.arange(B) * L, B * L, dtype=jnp.float32)
    sel = jnp.concatenate([mean_rows, cls_rows], axis=0)                       # (2B, B*L)

    vspec = pl.BlockSpec(memory_space=pltpu.MemorySpace.VMEM)   # whole array, VMEM-resident
    pooled_all = pl.pallas_call(
        fused_encoder_kernel,
        out_shape=jax.ShapeDtypeStruct((B, OUT_PAD), jnp.float32),
        in_specs=[vspec] * 9,
        out_specs=vspec,
        # tiny model: defaults suffice; explicit limit is the scaling hook for v7x/v5e
        compiler_params=pltpu.CompilerParams(vmem_limit_bytes=32 * 1024 * 1024),
    )(x2d, attn_bias, sel,
      params['w_attn'], params['w_f1'], params['w_f2'], params['vec'],
      params['wp'], params['bp'])

    if pooling_type == 'pooler':
        return pooled_all[:, 2 * H:3 * H]
    elif pooling_type == 'cls':
        return pooled_all[:, H:2 * H]
    else:  # 'mean_pool'
        return pooled_all[:, 0:H]


if __name__ == '__main__':
    key = jax.random.PRNGKey(0)
    k_param, k_ids = jax.random.split(key)

    params = init_params(k_param)

    # synthetic "tokenized" batch: padded input_ids + attention_mask
    input_ids = jax.random.randint(k_ids, (B, L), 0, V, dtype=jnp.int32)
    lengths = jnp.array([L, 5], dtype=jnp.int32)                 # second example padded
    attention_mask = (jnp.arange(L)[None, :] < lengths[:, None]).astype(jnp.int32)

    outs = {}
    for pt in ('mean_pool', 'cls', 'pooler'):
        outs[pt] = jax.block_until_ready(
            query_encoder_forward(input_ids, attention_mask, params,
                                  pooling_type=pt))
        assert outs[pt].shape == (B, H)
        assert bool(jnp.all(jnp.isfinite(outs[pt])))

    print("KERNEL_OK")
</pallas_src>

<mosaic_0001>
module attributes {stable_mosaic.version = 11 : i64} {
  func.func @fused_encoder_kernel(%arg0: memref<16x32xf32, #tpu.memory_space<vmem>>, %arg1: memref<16x16xf32, #tpu.memory_space<vmem>>, %arg2: memref<4x16xf32, #tpu.memory_space<vmem>>, %arg3: memref<2x32x128xbf16, #tpu.memory_space<vmem>>, %arg4: memref<2x32x64xbf16, #tpu.memory_space<vmem>>, %arg5: memref<2x64x32xbf16, #tpu.memory_space<vmem>>, %arg6: memref<2x3x128xf32, #tpu.memory_space<vmem>>, %arg7: memref<32x32xbf16, #tpu.memory_space<vmem>>, %arg8: memref<1x32xf32, #tpu.memory_space<vmem>>, %arg9: memref<2x128xf32, #tpu.memory_space<vmem>>) attributes {dimension_semantics = [], scalar_prefetch = 0 : i64, scratch_operands = 0 : i64, tpu.core_type = #tpu.core_type<tc>} {
    %c0 = arith.constant 0 : index
    %c0_0 = arith.constant 0 : index
    %0 = vector.load %arg0[%c0, %c0_0] : memref<16x32xf32, #tpu.memory_space<vmem>>, vector<16x32xf32>
    %c0_1 = arith.constant 0 : index
    %c0_2 = arith.constant 0 : index
    %1 = vector.load %arg1[%c0_1, %c0_2] : memref<16x16xf32, #tpu.memory_space<vmem>>, vector<16x16xf32>
    %c0_i32 = arith.constant 0 : i32
    %2 = arith.index_cast %c0_i32 : i32 to index
    %c0_3 = arith.constant 0 : index
    %c0_4 = arith.constant 0 : index
    %3 = vector.load %arg3[%2, %c0_3, %c0_4] : memref<2x32x128xbf16, #tpu.memory_space<vmem>>, vector<1x32x128xbf16>
    %4 = vector.shape_cast %3 : vector<1x32x128xbf16> to vector<32x128xbf16>
    %5 = arith.index_cast %c0_i32 : i32 to index
    %c0_5 = arith.constant 0 : index
    %c0_6 = arith.constant 0 : index
    %6 = vector.load %arg6[%5, %c0_5, %c0_6] : memref<2x3x128xf32, #tpu.memory_space<vmem>>, vector<1x3x128xf32>
    %7 = vector.shape_cast %6 : vector<1x3x128xf32> to vector<3x128xf32>
    %8 = vector.extract_strided_slice %7 {offsets = [0, 0], sizes = [1, 96], strides = [1, 1]} : vector<3x128xf32> to vector<1x96xf32>
    %9 = vector.extract_strided_slice %7 {offsets = [0, 96], sizes = [1, 32], strides = [1, 1]} : vector<3x128xf32> to vector<1x32xf32>
    %10 = vector.extract_strided_slice %7 {offsets = [1, 0], sizes = [1, 32], strides = [1, 1]} : vector<3x128xf32> to vector<1x32xf32>
    %11 = vector.extract_strided_slice %7 {offsets = [1, 32], sizes = [1, 32], strides = [1, 1]} : vector<3x128xf32> to vector<1x32xf32>
    %12 = vector.extract_strided_slice %7 {offsets = [1, 64], sizes = [1, 64], strides = [1, 1]} : vector<3x128xf32> to vector<1x64xf32>
    %13 = vector.extract_strided_slice %7 {offsets = [2, 0], sizes = [1, 32], strides = [1, 1]} : vector<3x128xf32> to vector<1x32xf32>
    %14 = vector.extract_strided_slice %7 {offsets = [2, 32], sizes = [1, 32], strides = [1, 1]} : vector<3x128xf32> to vector<1x32xf32>
    %15 = vector.extract_strided_slice %7 {offsets = [2, 64], sizes = [1, 32], strides = [1, 1]} : vector<3x128xf32> to vector<1x32xf32>
    %16 = arith.truncf %0 : vector<16x32xf32> to vector<16x32xbf16>
    %17 = vector.extract_strided_slice %4 {offsets = [0, 0], sizes = [32, 96], strides = [1, 1]} : vector<32x128xbf16> to vector<32x96xbf16>
    %cst = arith.constant dense<0.000000e+00> : vector<16x96xf32>
    %18 = tpu.matmul %16, %17, %cst {dimension_numbers = #tpu.dot_dimension_numbers<[1], [0], [0], [1], [0, 0, 1, 1], [], []>} : vector<16x32xbf16>, vector<32x96xbf16>, vector<16x96xf32> -> vector<16x96xf32>
    %19 = vector.broadcast %8 : vector<1x96xf32> to vector<16x96xf32>
    %20 = arith.addf %18, %19 : vector<16x96xf32>
    %21 = vector.extract_strided_slice %20 {offsets = [0, 0], sizes = [16, 32], strides = [1, 1]} : vector<16x96xf32> to vector<16x32xf32>
    %22 = vector.extract_strided_slice %20 {offsets = [0, 32], sizes = [16, 32], strides = [1, 1]} : vector<16x96xf32> to vector<16x32xf32>
    %23 = vector.extract_strided_slice %20 {offsets = [0, 64], sizes = [16, 32], strides = [1, 1]} : vector<16x96xf32> to vector<16x32xf32>
    %24 = arith.truncf %21 : vector<16x32xf32> to vector<16x32xbf16>
    %25 = arith.truncf %22 : vector<16x32xf32> to vector<16x32xbf16>
    %26 = tpu.transpose %25, [1, 0] : vector<16x32xbf16> -> vector<32x16xbf16>
    %cst_7 = arith.constant dense<0.000000e+00> : vector<16x16xf32>
    %27 = tpu.matmul %24, %26, %cst_7 {dimension_numbers = #tpu.dot_dimension_numbers<[1], [0], [0], [1], [0, 0, 1, 1], [], []>} : vector<16x32xbf16>, vector<32x16xbf16>, vector<16x16xf32> -> vector<16x16xf32>
    %cst_8 = arith.constant 0.176776692 : f32
    %28 = vector.broadcast %cst_8 : f32 to vector<16x16xf32>
    %29 = arith.mulf %27, %28 : vector<16x16xf32>
    %30 = arith.addf %29, %1 : vector<16x16xf32>
    %cst_9 = arith.constant dense<0xFF800000> : vector<16xf32>
    %31 = vector.multi_reduction <maximumf>, %30, %cst_9 [1] : vector<16x16xf32> to vector<16xf32>
    %32 = vector.shape_cast %31 : vector<16xf32> to vector<16x1xf32>
    %33 = vector.broadcast %32 : vector<16x1xf32> to vector<16x16xf32>
    %34 = arith.subf %30, %33 : vector<16x16xf32>
    %35 = math.exp %34 : vector<16x16xf32>
    %cst_10 = arith.constant dense<0.000000e+00> : vector<16xf32>
    %36 = vector.multi_reduction <add>, %35, %cst_10 [1] : vector<16x16xf32> to vector<16xf32>
    %37 = vector.shape_cast %36 : vector<16xf32> to vector<16x1xf32>
    %38 = vector.broadcast %37 : vector<16x1xf32> to vector<16x16xf32>
    %39 = arith.divf %35, %38 : vector<16x16xf32>
    %40 = arith.truncf %39 : vector<16x16xf32> to vector<16x16xbf16>
    %41 = arith.truncf %23 : vector<16x32xf32> to vector<16x32xbf16>
    %cst_11 = arith.constant dense<0.000000e+00> : vector<16x32xf32>
    %42 = tpu.matmul %40, %41, %cst_11 {dimension_numbers = #tpu.dot_dimension_numbers<[1], [0], [0], [1], [0, 0, 1, 1], [], []>} : vector<16x16xbf16>, vector<16x32xbf16>, vector<16x32xf32> -> vector<16x32xf32>
    %43 = arith.truncf %42 : vector<16x32xf32> to vector<16x32xbf16>
    %44 = vector.extract_strided_slice %4 {offsets = [0, 96], sizes = [32, 32], strides = [1, 1]} : vector<32x128xbf16> to vector<32x32xbf16>
    %cst_12 = arith.constant dense<0.000000e+00> : vector<16x32xf32>
    %45 = tpu.matmul %43, %44, %cst_12 {dimension_numbers = #tpu.dot_dimension_numbers<[1], [0], [0], [1], [0, 0, 1, 1], [], []>} : vector<16x32xbf16>, vector<32x32xbf16>, vector<16x32xf32> -> vector<16x32xf32>
    %46 = vector.broadcast %9 : vector<1x32xf32> to vector<16x32xf32>
    %47 = arith.addf %45, %46 : vector<16x32xf32>
    %48 = arith.addf %0, %47 : vector<16x32xf32>
    %cst_13 = arith.constant dense<0.000000e+00> : vector<16xf32>
    %49 = vector.multi_reduction <add>, %48, %cst_13 [1] : vector<16x32xf32> to vector<16xf32>
    %50 = vector.shape_cast %49 : vector<16xf32> to vector<16x1xf32>
    %cst_14 = arith.constant 3.200000e+01 : f32
    %51 = vector.broadcast %cst_14 : f32 to vector<16x1xf32>
    %52 = arith.divf %50, %51 : vector<16x1xf32>
    %53 = vector.broadcast %52 : vector<16x1xf32> to vector<16x32xf32>
    %54 = arith.subf %48, %53 : vector<16x32xf32>
    %55 = arith.mulf %54, %54 : vector<16x32xf32>
    %cst_15 = arith.constant dense<0.000000e+00> : vector<16xf32>
    %56 = vector.multi_reduction <add>, %55, %cst_15 [1] : vector<16x32xf32> to vector<16xf32>
    %57 = vector.shape_cast %56 : vector<16xf32> to vector<16x1xf32>
    %cst_16 = arith.constant 3.200000e+01 : f32
    %58 = vector.broadcast %cst_16 : f32 to vector<16x1xf32>
    %59 = arith.divf %57, %58 : vector<16x1xf32>
    %60 = vector.broadcast %52 : vector<16x1xf32> to vector<16x32xf32>
    %61 = arith.subf %48, %60 : vector<16x32xf32>
    %cst_17 = arith.constant 9.99999996E-13 : f32
    %62 = vector.broadcast %cst_17 : f32 to vector<16x1xf32>
    %63 = arith.addf %59, %62 : vector<16x1xf32>
    %64 = math.rsqrt %63 : vector<16x1xf32>
    %65 = vector.broadcast %64 : vector<16x1xf32> to vector<16x32xf32>
    %66 = arith.mulf %61, %65 : vector<16x32xf32>
    %67 = vector.broadcast %10 : vector<1x32xf32> to vector<16x32xf32>
    %68 = arith.mulf %66, %67 : vector<16x32xf32>
    %69 = vector.broadcast %11 : vector<1x32xf32> to vector<16x32xf32>
    %70 = arith.addf %68, %69 : vector<16x32xf32>
    %71 = arith.truncf %70 : vector<16x32xf32> to vector<16x32xbf16>
    %72 = arith.index_cast %c0_i32 : i32 to index
    %c0_18 = arith.constant 0 : index
    %c0_19 = arith.constant 0 : index
    %73 = vector.load %arg4[%72, %c0_18, %c0_19] : memref<2x32x64xbf16, #tpu.memory_space<vmem>>, vector<1x32x64xbf16>
    %74 = vector.shape_cast %73 : vector<1x32x64xbf16> to vector<32x64xbf16>
    %cst_20 = arith.constant dense<0.000000e+00> : vector<16x64xf32>
    %75 = tpu.matmul %71, %74, %cst_20 {dimension_numbers = #tpu.dot_dimension_numbers<[1], [0], [0], [1], [0, 0, 1, 1], [], []>} : vector<16x32xbf16>, vector<32x64xbf16>, vector<16x64xf32> -> vector<16x64xf32>
    %76 = vector.broadcast %12 : vector<1x64xf32> to vector<16x64xf32>
    %77 = arith.addf %75, %76 : vector<16x64xf32>
    %78 = arith.mulf %77, %77 : vector<16x64xf32>
    %79 = arith.mulf %77, %78 : vector<16x64xf32>
    %cst_21 = arith.constant 4.471500e-02 : f32
    %80 = vector.broadcast %cst_21 : f32 to vector<16x64xf32>
    %81 = arith.mulf %80, %79 : vector<16x64xf32>
    %82 = arith.addf %77, %81 : vector<16x64xf32>
    %cst_22 = arith.constant 0.797884583 : f32
    %83 = vector.broadcast %cst_22 : f32 to vector<16x64xf32>
    %84 = arith.mulf %83, %82 : vector<16x64xf32>
    %85 = math.tanh %84 : vector<16x64xf32>
    %cst_23 = arith.constant 1.000000e+00 : f32
    %86 = vector.broadcast %cst_23 : f32 to vector<16x64xf32>
    %87 = arith.addf %86, %85 : vector<16x64xf32>
    %cst_24 = arith.constant 5.000000e-01 : f32
    %88 = vector.broadcast %cst_24 : f32 to vector<16x64xf32>
    %89 = arith.mulf %88, %87 : vector<16x64xf32>
    %90 = arith.mulf %77, %89 : vector<16x64xf32>
    %91 = arith.truncf %90 : vector<16x64xf32> to vector<16x64xbf16>
    %92 = arith.index_cast %c0_i32 : i32 to index
    %c0_25 = arith.constant 0 : index
    %c0_26 = arith.constant 0 : index
    %93 = vector.load %arg5[%92, %c0_25, %c0_26] : memref<2x64x32xbf16, #tpu.memory_space<vmem>>, vector<1x64x32xbf16>
    %94 = vector.shape_cast %93 : vector<1x64x32xbf16> to vector<64x32xbf16>
    %cst_27 = arith.constant dense<0.000000e+00> : vector<16x32xf32>
    %95 = tpu.matmul %91, %94, %cst_27 {dimension_numbers = #tpu.dot_dimension_numbers<[1], [0], [0], [1], [0, 0, 1, 1], [], []>} : vector<16x64xbf16>, vector<64x32xbf16>, vector<16x32xf32> -> vector<16x32xf32>
    %96 = vector.broadcast %13 : vector<1x32xf32> to vector<16x32xf32>
    %97 = arith.addf %95, %96 : vector<16x32xf32>
    %98 = arith.addf %70, %97 : vector<16x32xf32>
    %cst_28 = arith.constant dense<0.000000e+00> : vector<16xf32>
    %99 = vector.multi_reduction <add>, %98, %cst_28 [1] : vector<16x32xf32> to vector<16xf32>
    %100 = vector.shape_cast %99 : vector<16xf32> to vector<16x1xf32>
    %cst_29 = arith.constant 3.200000e+01 : f32
    %101 = vector.broadcast %cst_29 : f32 to vector<16x1xf32>
    %102 = arith.divf %100, %101 : vector<16x1xf32>
    %103 = vector.broadcast %102 : vector<16x1xf32> to vector<16x32xf32>
    %104 = arith.subf %98, %103 : vector<16x32xf32>
    %105 = arith.mulf %104, %104 : vector<16x32xf32>
    %cst_30 = arith.constant dense<0.000000e+00> : vector<16xf32>
    %106 = vector.multi_reduction <add>, %105, %cst_30 [1] : vector<16x32xf32> to vector<16xf32>
    %107 = vector.shape_cast %106 : vector<16xf32> to vector<16x1xf32>
    %cst_31 = arith.constant 3.200000e+01 : f32
    %108 = vector.broadcast %cst_31 : f32 to vector<16x1xf32>
    %109 = arith.divf %107, %108 : vector<16x1xf32>
    %110 = vector.broadcast %102 : vector<16x1xf32> to vector<16x32xf32>
    %111 = arith.subf %98, %110 : vector<16x32xf32>
    %cst_32 = arith.constant 9.99999996E-13 : f32
    %112 = vector.broadcast %cst_32 : f32 to vector<16x1xf32>
    %113 = arith.addf %109, %112 : vector<16x1xf32>
    %114 = math.rsqrt %113 : vector<16x1xf32>
    %115 = vector.broadcast %114 : vector<16x1xf32> to vector<16x32xf32>
    %116 = arith.mulf %111, %115 : vector<16x32xf32>
    %117 = vector.broadcast %14 : vector<1x32xf32> to vector<16x32xf32>
    %118 = arith.mulf %116, %117 : vector<16x32xf32>
    %119 = vector.broadcast %15 : vector<1x32xf32> to vector<16x32xf32>
    %120 = arith.addf %118, %119 : vector<16x32xf32>
    %c1_i32 = arith.constant 1 : i32
    %121 = arith.index_cast %c1_i32 : i32 to index
    %c0_33 = arith.constant 0 : index
    %c0_34 = arith.constant 0 : index
    %122 = vector.load %arg3[%121, %c0_33, %c0_34] : memref<2x32x128xbf16, #tpu.memory_space<vmem>>, vector<1x32x128xbf16>
    %123 = vector.shape_cast %122 : vector<1x32x128xbf16> to vector<32x128xbf16>
    %124 = arith.index_cast %c1_i32 : i32 to index
    %c0_35 = arith.constant 0 : index
    %c0_36 = arith.constant 0 : index
    %125 = vector.load %arg6[%124, %c0_35, %c0_36] : memref<2x3x128xf32, #tpu.memory_space<vmem>>, vector<1x3x128xf32>
    %126 = vector.shape_cast %125 : vector<1x3x128xf32> to vector<3x128xf32>
    %127 = vector.extract_strided_slice %126 {offsets = [0, 0], sizes = [1, 96], strides = [1, 1]} : vector<3x128xf32> to vector<1x96xf32>
    %128 = vector.extract_strided_slice %126 {offsets = [0, 96], sizes = [1, 32], strides = [1, 1]} : vector<3x128xf32> to vector<1x32xf32>
    %129 = vector.extract_strided_slice %126 {offsets = [1, 0], sizes = [1, 32], strides = [1, 1]} : vector<3x128xf32> to vector<1x32xf32>
    %130 = vector.extract_strided_slice %126 {offsets = [1, 32], sizes = [1, 32], strides = [1, 1]} : vector<3x128xf32> to vector<1x32xf32>
    %131 = vector.extract_strided_slice %126 {offsets = [1, 64], sizes = [1, 64], strides = [1, 1]} : vector<3x128xf32> to vector<1x64xf32>
    %132 = vector.extract_strided_slice %126 {offsets = [2, 0], sizes = [1, 32], strides = [1, 1]} : vector<3x128xf32> to vector<1x32xf32>
    %133 = vector.extract_strided_slice %126 {offsets = [2, 32], sizes = [1, 32], strides = [1, 1]} : vector<3x128xf32> to vector<1x32xf32>
    %134 = vector.extract_strided_slice %126 {offsets = [2, 64], sizes = [1, 32], strides = [1, 1]} : vector<3x128xf32> to vector<1x32xf32>
    %135 = arith.truncf %120 : vector<16x32xf32> to vector<16x32xbf16>
    %136 = vector.extract_strided_slice %123 {offsets = [0, 0], sizes = [32, 96], strides = [1, 1]} : vector<32x128xbf16> to vector<32x96xbf16>
    %cst_37 = arith.constant dense<0.000000e+00> : vector<16x96xf32>
    %137 = tpu.matmul %135, %136, %cst_37 {dimension_numbers = #tpu.dot_dimension_numbers<[1], [0], [0], [1], [0, 0, 1, 1], [], []>} : vector<16x32xbf16>, vector<32x96xbf16>, vector<16x96xf32> -> vector<16x96xf32>
    %138 = vector.broadcast %127 : vector<1x96xf32> to vector<16x96xf32>
    %139 = arith.addf %137, %138 : vector<16x96xf32>
    %140 = vector.extract_strided_slice %139 {offsets = [0, 0], sizes = [16, 32], strides = [1, 1]} : vector<16x96xf32> to vector<16x32xf32>
    %141 = vector.extract_strided_slice %139 {offsets = [0, 32], sizes = [16, 32], strides = [1, 1]} : vector<16x96xf32> to vector<16x32xf32>
    %142 = vector.extract_strided_slice %139 {offsets = [0, 64], sizes = [16, 32], strides = [1, 1]} : vector<16x96xf32> to vector<16x32xf32>
    %143 = arith.truncf %140 : vector<16x32xf32> to vector<16x32xbf16>
    %144 = arith.truncf %141 : vector<16x32xf32> to vector<16x32xbf16>
    %145 = tpu.transpose %144, [1, 0] : vector<16x32xbf16> -> vector<32x16xbf16>
    %cst_38 = arith.constant dense<0.000000e+00> : vector<16x16xf32>
    %146 = tpu.matmul %143, %145, %cst_38 {dimension_numbers = #tpu.dot_dimension_numbers<[1], [0], [0], [1], [0, 0, 1, 1], [], []>} : vector<16x32xbf16>, vector<32x16xbf16>, vector<16x16xf32> -> vector<16x16xf32>
    %cst_39 = arith.constant 0.176776692 : f32
    %147 = vector.broadcast %cst_39 : f32 to vector<16x16xf32>
    %148 = arith.mulf %146, %147 : vector<16x16xf32>
    %149 = arith.addf %148, %1 : vector<16x16xf32>
    %cst_40 = arith.constant dense<0xFF800000> : vector<16xf32>
    %150 = vector.multi_reduction <maximumf>, %149, %cst_40 [1] : vector<16x16xf32> to vector<16xf32>
    %151 = vector.shape_cast %150 : vector<16xf32> to vector<16x1xf32>
    %152 = vector.broadcast %151 : vector<16x1xf32> to vector<16x16xf32>
    %153 = arith.subf %149, %152 : vector<16x16xf32>
    %154 = math.exp %153 : vector<16x16xf32>
    %cst_41 = arith.constant dense<0.000000e+00> : vector<16xf32>
    %155 = vector.multi_reduction <add>, %154, %cst_41 [1] : vector<16x16xf32> to vector<16xf32>
    %156 = vector.shape_cast %155 : vector<16xf32> to vector<16x1xf32>
    %157 = vector.broadcast %156 : vector<16x1xf32> to vector<16x16xf32>
    %158 = arith.divf %154, %157 : vector<16x16xf32>
    %159 = arith.truncf %158 : vector<16x16xf32> to vector<16x16xbf16>
    %160 = arith.truncf %142 : vector<16x32xf32> to vector<16x32xbf16>
    %cst_42 = arith.constant dense<0.000000e+00> : vector<16x32xf32>
    %161 = tpu.matmul %159, %160, %cst_42 {dimension_numbers = #tpu.dot_dimension_numbers<[1], [0], [0], [1], [0, 0, 1, 1], [], []>} : vector<16x16xbf16>, vector<16x32xbf16>, vector<16x32xf32> -> vector<16x32xf32>
    %162 = arith.truncf %161 : vector<16x32xf32> to vector<16x32xbf16>
    %163 = vector.extract_strided_slice %123 {offsets = [0, 96], sizes = [32, 32], strides = [1, 1]} : vector<32x128xbf16> to vector<32x32xbf16>
    %cst_43 = arith.constant dense<0.000000e+00> : vector<16x32xf32>
    %164 = tpu.matmul %162, %163, %cst_43 {dimension_numbers = #tpu.dot_dimension_numbers<[1], [0], [0], [1], [0, 0, 1, 1], [], []>} : vector<16x32xbf16>, vector<32x32xbf16>, vector<16x32xf32> -> vector<16x32xf32>
    %165 = vector.broadcast %128 : vector<1x32xf32> to vector<16x32xf32>
    %166 = arith.addf %164, %165 : vector<16x32xf32>
    %167 = arith.addf %120, %166 : vector<16x32xf32>
    %cst_44 = arith.constant dense<0.000000e+00> : vector<16xf32>
    %168 = vector.multi_reduction <add>, %167, %cst_44 [1] : vector<16x32xf32> to vector<16xf32>
    %169 = vector.shape_cast %168 : vector<16xf32> to vector<16x1xf32>
    %cst_45 = arith.constant 3.200000e+01 : f32
    %170 = vector.broadcast %cst_45 : f32 to vector<16x1xf32>
    %171 = arith.divf %169, %170 : vector<16x1xf32>
    %172 = vector.broadcast %171 : vector<16x1xf32> to vector<16x32xf32>
    %173 = arith.subf %167, %172 : vector<16x32xf32>
    %174 = arith.mulf %173, %173 : vector<16x32xf32>
    %cst_46 = arith.constant dense<0.000000e+00> : vector<16xf32>
    %175 = vector.multi_reduction <add>, %174, %cst_46 [1] : vector<16x32xf32> to vector<16xf32>
    %176 = vector.shape_cast %175 : vector<16xf32> to vector<16x1xf32>
    %cst_47 = arith.constant 3.200000e+01 : f32
    %177 = vector.broadcast %cst_47 : f32 to vector<16x1xf32>
    %178 = arith.divf %176, %177 : vector<16x1xf32>
    %179 = vector.broadcast %171 : vector<16x1xf32> to vector<16x32xf32>
    %180 = arith.subf %167, %179 : vector<16x32xf32>
    %cst_48 = arith.constant 9.99999996E-13 : f32
    %181 = vector.broadcast %cst_48 : f32 to vector<16x1xf32>
    %182 = arith.addf %178, %181 : vector<16x1xf32>
    %183 = math.rsqrt %182 : vector<16x1xf32>
    %184 = vector.broadcast %183 : vector<16x1xf32> to vector<16x32xf32>
    %185 = arith.mulf %180, %184 : vector<16x32xf32>
    %186 = vector.broadcast %129 : vector<1x32xf32> to vector<16x32xf32>
    %187 = arith.mulf %185, %186 : vector<16x32xf32>
    %188 = vector.broadcast %130 : vector<1x32xf32> to vector<16x32xf32>
    %189 = arith.addf %187, %188 : vector<16x32xf32>
    %190 = arith.truncf %189 : vector<16x32xf32> to vector<16x32xbf16>
    %191 = arith.index_cast %c1_i32 : i32 to index
    %c0_49 = arith.constant 0 : index
    %c0_50 = arith.constant 0 : index
    %192 = vector.load %arg4[%191, %c0_49, %c0_50] : memref<2x32x64xbf16, #tpu.memory_space<vmem>>, vector<1x32x64xbf16>
    %193 = vector.shape_cast %192 : vector<1x32x64xbf16> to vector<32x64xbf16>
    %cst_51 = arith.constant dense<0.000000e+00> : vector<16x64xf32>
    %194 = tpu.matmul %190, %193, %cst_51 {dimension_numbers = #tpu.dot_dimension_numbers<[1], [0], [0], [1], [0, 0, 1, 1], [], []>} : vector<16x32xbf16>, vector<32x64xbf16>, vector<16x64xf32> -> vector<16x64xf32>
    %195 = vector.broadcast %131 : vector<1x64xf32> to vector<16x64xf32>
    %196 = arith.addf %194, %195 : vector<16x64xf32>
    %197 = arith.mulf %196, %196 : vector<16x64xf32>
    %198 = arith.mulf %196, %197 : vector<16x64xf32>
    %cst_52 = arith.constant 4.471500e-02 : f32
    %199 = vector.broadcast %cst_52 : f32 to vector<16x64xf32>
    %200 = arith.mulf %199, %198 : vector<16x64xf32>
    %201 = arith.addf %196, %200 : vector<16x64xf32>
    %cst_53 = arith.constant 0.797884583 : f32
    %202 = vector.broadcast %cst_53 : f32 to vector<16x64xf32>
    %203 = arith.mulf %202, %201 : vector<16x64xf32>
    %204 = math.tanh %203 : vector<16x64xf32>
    %cst_54 = arith.constant 1.000000e+00 : f32
    %205 = vector.broadcast %cst_54 : f32 to vector<16x64xf32>
    %206 = arith.addf %205, %204 : vector<16x64xf32>
    %cst_55 = arith.constant 5.000000e-01 : f32
    %207 = vector.broadcast %cst_55 : f32 to vector<16x64xf32>
    %208 = arith.mulf %207, %206 : vector<16x64xf32>
    %209 = arith.mulf %196, %208 : vector<16x64xf32>
    %210 = arith.truncf %209 : vector<16x64xf32> to vector<16x64xbf16>
    %211 = arith.index_cast %c1_i32 : i32 to index
    %c0_56 = arith.constant 0 : index
    %c0_57 = arith.constant 0 : index
    %212 = vector.load %arg5[%211, %c0_56, %c0_57] : memref<2x64x32xbf16, #tpu.memory_space<vmem>>, vector<1x64x32xbf16>
    %213 = vector.shape_cast %212 : vector<1x64x32xbf16> to vector<64x32xbf16>
    %cst_58 = arith.constant dense<0.000000e+00> : vector<16x32xf32>
    %214 = tpu.matmul %210, %213, %cst_58 {dimension_numbers = #tpu.dot_dimension_numbers<[1], [0], [0], [1], [0, 0, 1, 1], [], []>} : vector<16x64xbf16>, vector<64x32xbf16>, vector<16x32xf32> -> vector<16x32xf32>
    %215 = vector.broadcast %132 : vector<1x32xf32> to vector<16x32xf32>
    %216 = arith.addf %214, %215 : vector<16x32xf32>
    %217 = arith.addf %189, %216 : vector<16x32xf32>
    %cst_59 = arith.constant dense<0.000000e+00> : vector<16xf32>
    %218 = vector.multi_reduction <add>, %217, %cst_59 [1] : vector<16x32xf32> to vector<16xf32>
    %219 = vector.shape_cast %218 : vector<16xf32> to vector<16x1xf32>
    %cst_60 = arith.constant 3.200000e+01 : f32
    %220 = vector.broadcast %cst_60 : f32 to vector<16x1xf32>
    %221 = arith.divf %219, %220 : vector<16x1xf32>
    %222 = vector.broadcast %221 : vector<16x1xf32> to vector<16x32xf32>
    %223 = arith.subf %217, %222 : vector<16x32xf32>
    %224 = arith.mulf %223, %223 : vector<16x32xf32>
    %cst_61 = arith.constant dense<0.000000e+00> : vector<16xf32>
    %225 = vector.multi_reduction <add>, %224, %cst_61 [1] : vector<16x32xf32> to vector<16xf32>
    %226 = vector.shape_cast %225 : vector<16xf32> to vector<16x1xf32>
    %cst_62 = arith.constant 3.200000e+01 : f32
    %227 = vector.broadcast %cst_62 : f32 to vector<16x1xf32>
    %228 = arith.divf %226, %227 : vector<16x1xf32>
    %229 = vector.broadcast %221 : vector<16x1xf32> to vector<16x32xf32>
    %230 = arith.subf %217, %229 : vector<16x32xf32>
    %cst_63 = arith.constant 9.99999996E-13 : f32
    %231 = vector.broadcast %cst_63 : f32 to vector<16x1xf32>
    %232 = arith.addf %228, %231 : vector<16x1xf32>
    %233 = math.rsqrt %232 : vector<16x1xf32>
    %234 = vector.broadcast %233 : vector<16x1xf32> to vector<16x32xf32>
    %235 = arith.mulf %230, %234 : vector<16x32xf32>
    %236 = vector.broadcast %133 : vector<1x32xf32> to vector<16x32xf32>
    %237 = arith.mulf %235, %236 : vector<16x32xf32>
    %238 = vector.broadcast %134 : vector<1x32xf32> to vector<16x32xf32>
    %239 = arith.addf %237, %238 : vector<16x32xf32>
    %c2_i32 = arith.constant 2 : i32
    %c0_64 = arith.constant 0 : index
    %c0_65 = arith.constant 0 : index
    %240 = vector.load %arg2[%c0_64, %c0_65] : memref<4x16xf32, #tpu.memory_space<vmem>>, vector<4x16xf32>
    %cst_66 = arith.constant dense<0.000000e+00> : vector<4x32xf32>
    %241 = tpu.matmul %240, %239, %cst_66 {dimension_numbers = #tpu.dot_dimension_numbers<[1], [0], [0], [1], [0, 0, 1, 1], [], []>} : vector<4x16xf32>, vector<16x32xf32>, vector<4x32xf32> -> vector<4x32xf32>
    %242 = vector.extract_strided_slice %241 {offsets = [0, 0], sizes = [2, 32], strides = [1, 1]} : vector<4x32xf32> to vector<2x32xf32>
    %243 = vector.extract_strided_slice %241 {offsets = [2, 0], sizes = [2, 32], strides = [1, 1]} : vector<4x32xf32> to vector<2x32xf32>
    %244 = arith.truncf %243 : vector<2x32xf32> to vector<2x32xbf16>
    %c0_67 = arith.constant 0 : index
    %c0_68 = arith.constant 0 : index
    %245 = vector.load %arg7[%c0_67, %c0_68] : memref<32x32xbf16, #tpu.memory_space<vmem>>, vector<32x32xbf16>
    %cst_69 = arith.constant dense<0.000000e+00> : vector<2x32xf32>
    %246 = tpu.matmul %244, %245, %cst_69 {dimension_numbers = #tpu.dot_dimension_numbers<[1], [0], [0], [1], [0, 0, 1, 1], [], []>} : vector<2x32xbf16>, vector<32x32xbf16>, vector<2x32xf32> -> vector<2x32xf32>
    %c0_70 = arith.constant 0 : index
    %c0_71 = arith.constant 0 : index
    %247 = vector.load %arg8[%c0_70, %c0_71] : memref<1x32xf32, #tpu.memory_space<vmem>>, vector<1x32xf32>
    %248 = vector.broadcast %247 : vector<1x32xf32> to vector<2x32xf32>
    %249 = arith.addf %246, %248 : vector<2x32xf32>
    %250 = math.tanh %249 : vector<2x32xf32>
    %cst_72 = arith.constant 0.000000e+00 : f32
    %251 = vector.broadcast %cst_72 : f32 to vector<2x32xf32>
    %252 = tpu.concatenate %242, %243, %250, %251 in 1 : vector<2x32xf32>, vector<2x32xf32>, vector<2x32xf32>, vector<2x32xf32> -> vector<2x128xf32>
    %c0_73 = arith.constant 0 : index
    %c0_74 = arith.constant 0 : index
    %253 = vector.load %arg9[%c0_73, %c0_74] : memref<2x128xf32, #tpu.memory_space<vmem>>, vector<2x128xf32>
    tpu.vector_store %arg9[%c0_73, %c0_74], %252 {strides = array<i32>} : memref<2x128xf32, #tpu.memory_space<vmem>>, vector<2x128xf32>,
    return
  }
}

</mosaic_0001>

<llo_original>
// kernel: query_encoder_forward.1
$region0: #{query_encoder_forward.1}
  #allocation0 [shape = 'u32[]', space=smem, size = 0x4, offset = 0x4, fixed_abs, tag = 'smem constant byte address 0x4 - core index']
  #allocation1 [shape = 'u32[72,128]{1,0:T(1,128)}', space=vmem, size = 0x9000, scoped, tag = 'internal scratch']
  %s0 = inlined_call_operand.vmem [shape: f32[16,32], index: 0, kind: input, shape index: {}]
  %s1 = inlined_call_operand.vmem [shape: f32[16,16], index: 1, kind: input, shape index: {}]
  %s2 = inlined_call_operand.vmem [shape: f32[4,16], index: 2, kind: input, shape index: {}]
  %s3 = inlined_call_operand.vmem [shape: bf16[2,32,128], index: 3, kind: input, shape index: {}]
  %s4 = inlined_call_operand.vmem [shape: bf16[2,32,64], index: 4, kind: input, shape index: {}]
  %s5 = inlined_call_operand.vmem [shape: bf16[2,64,32], index: 5, kind: input, shape index: {}]
  %s6 = inlined_call_operand.vmem [shape: f32[2,3,128], index: 6, kind: input, shape index: {}]
  %s7 = inlined_call_operand.vmem [shape: bf16[32,32], index: 7, kind: input, shape index: {}]
  %s8 = inlined_call_operand.vmem [shape: f32[1,32], index: 8, kind: input, shape index: {}]
  %s9 = inlined_call_operand.hbm [shape: f32[2,128], index: 9, kind: output, shape index: {}]
  %s10 = sld [smem:[#allocation0]]
  $region46: #{query_encoder_forward.1} parent=0
    _
  %s12 = ssub.s32 1, %s10
  %s13 = scalar_select 0, %s12, %s10
  $region1: #{query_encoder_forward.1} parent=0
    #allocation2 [shape = 'u8[1024]{0}', space=vmem, size = 0x400, scoped, tag = 'output window, operand 0, single buffered']
    #allocation3 [shape = 's32[1]{0}', space=sflag, size = 0x4, scoped, tag = 'scoped memory for query_encoder_forward.1']
    %14 = vsyncpa [#allocation3], 0
    // Predicated region
    $region2: #{query_encoder_forward.1} parent=1 // pred_check
      _
    $region3: #{query_encoder_forward.1} parent=1 // pred_check_branch
      %16 = sbr.rel (0) target = $region5
    $region4: #{query_encoder_forward.1} parent=1 // pred_region
      _
    $region5: #{query_encoder_forward.1} parent=1 // pred_fallthru
      _
    // Predicated region
    $region6: #{query_encoder_forward.1} parent=1 // pred_check
      _
    $region7: #{query_encoder_forward.1} parent=1 // pred_check_branch
      %18 = sbr.rel (0) target = $region9
    $region8: #{query_encoder_forward.1} parent=1 // pred_region
      _
    $region9: #{query_encoder_forward.1} parent=1 // pred_fallthru
      _
    // Predicated region
    $region10: #{query_encoder_forward.1} parent=1 // pred_check
      _
    $region11: #{query_encoder_forward.1} parent=1 // pred_check_branch
      %20 = sbr.rel (0) target = $region13
    $region12: #{query_encoder_forward.1} parent=1 // pred_region
      _
    $region13: #{query_encoder_forward.1} parent=1 // pred_fallthru
      _
    // Predicated region
    $region14: #{query_encoder_forward.1} parent=1 // pred_check
      _
    $region15: #{query_encoder_forward.1} parent=1 // pred_check_branch
      %22 = sbr.rel (0) target = $region17
    $region16: #{query_encoder_forward.1} parent=1 // pred_region
      _
    $region17: #{query_encoder_forward.1} parent=1 // pred_fallthru
      _
    // Predicated region
    $region18: #{query_encoder_forward.1} parent=1 // pred_check
      _
    $region19: #{query_encoder_forward.1} parent=1 // pred_check_branch
      %24 = sbr.rel (0) target = $region21
    $region20: #{query_encoder_forward.1} parent=1 // pred_region
      _
    $region21: #{query_encoder_forward.1} parent=1 // pred_fallthru
      _
    // Predicated region
    $region22: #{query_encoder_forward.1} parent=1 // pred_check
      _
    $region23: #{query_encoder_forward.1} parent=1 // pred_check_branch
      %26 = sbr.rel (0) target = $region25
    $region24: #{query_encoder_forward.1} parent=1 // pred_region
      _
    $region25: #{query_encoder_forward.1} parent=1 // pred_fallthru
      _
    // Predicated region
    $region26: #{query_encoder_forward.1} parent=1 // pred_check
      _
    $region27: #{query_encoder_forward.1} parent=1 // pred_check_branch
      %28 = sbr.rel (0) target = $region29
    $region28: #{query_encoder_forward.1} parent=1 // pred_region
      _
    $region29: #{query_encoder_forward.1} parent=1 // pred_fallthru
      _
    // Predicated region
    $region30: #{query_encoder_forward.1} parent=1 // pred_check
      _
    $region31: #{query_encoder_forward.1} parent=1 // pred_check_branch
      %30 = sbr.rel (0) target = $region33
    $region32: #{query_encoder_forward.1} parent=1 // pred_region
      _
    $region33: #{query_encoder_forward.1} parent=1 // pred_fallthru
      _
    // Predicated region
    $region34: #{query_encoder_forward.1} parent=1 // pred_check
      _
    $region35: #{query_encoder_forward.1} parent=1 // pred_check_branch
      %32 = sbr.rel (0) target = $region37
    $region36: #{query_encoder_forward.1} parent=1 // pred_region
      _
    $region37: #{query_encoder_forward.1} parent=1 // pred_fallthru
      _
    %v34 = vld [vmem:[%s0] sm:$0xff]
    %v35 = vld [vmem:[%s0 + $0x8] sm:$0xff]
    %v36 = vld [vmem:[%s1] sm:$0xff]
    %v37 = vld [vmem:[%s1 + $0x8] sm:$0xff]
    %v38 = vld [vmem:[%s3] sm:$0xf]
    %v39 = vld [vmem:[%s3 + $0x4] sm:$0xf]
    %v40 = vld [vmem:[%s3 + $0x8] sm:$0xf]
    %v41 = vld [vmem:[%s3 + $0xc] sm:$0xf]
    %v42 = vld [vmem:[%s6] sm:$0x7]
    %v43 = vpack.c.bf16 %v35, %v34
    %v44 = vperm.slane %v42, 0
    %v49 = vunpack.c.l.b16 %v38
    %v50 = vunpack.c.l.b16 %v39
    %v51 = vunpack.c.l.b16 %v40
    %v52 = vunpack.c.l.b16 %v41
    %v53 = vpack.c.b16 %v50, %v49
    %v54 = vpack.c.b16 %v52, %v51
    %vm57 = vcmask 261120
    %v59 = vsel %vm57, %v43, 0
    %61 = vmatpush.bf16.msra.mxu0 0
    %62 = vmatpush.bf16.msra.mxu0 0
    %63 = vmatpush.bf16.msra.mxu0 0
    %64 = vmatpush.bf16.msra.mxu0 0
    %65 = vmatpush.bf16.msra.mxu0 0
    %66 = vmatpush.bf16.msra.mxu0 0
    %67 = vmatpush.bf16.msra.mxu0 %v54
    %68 = vmatpush.bf16.msra.mxu0 %v53
    %69 = vmatmul.bf16.gmra.mxu0 %v59
    %v70 = vpop.f32.mrf.mxu0
    %v71 = vadd.f32 %v44, %v70
    %v72 = vpop.f32.mrf.mxu0
    %v73 = vadd.f32 %v44, %v72
    %74 = vdwg.mxu0
    %v75 = vpack.c.bf16 %v73, %v71
    %77 = vrot.lane.b32.xlu0 %v75, 96
    %v78 = vpop.permute.xlu0 %77
    %v80 = vsel %vm57, %v75, 0
    %v83 = vsel %vm57, %v78, 0
    %85 = vmatpush.bf16.xpose.msra.mxu0 0
    %86 = vmatpush.bf16.xpose.msra.mxu0 0
    %87 = vmatpush.bf16.xpose.msra.mxu0 0
    %88 = vmatpush.bf16.xpose.msra.mxu0 0
    %89 = vmatpush.bf16.xpose.msra.mxu0 0
    %90 = vmatpush.bf16.xpose.msra.mxu0 0
    %91 = vmatpush.bf16.xpose.msra.mxu0 0
    %92 = vmatpush.bf16.xpose.msra.mxu0 %v83
    %93 = vmatmul.bf16.gmra.mxu0 %v80
    %v94 = vpop.f32.mrf.mxu0
    %v95 = vadd.f32 0.0, %v94
    %v96 = vpop.f32.mrf.mxu0
    %v97 = vadd.f32 0.0, %v96
    %98 = vdwg.mxu0
    %v99 = vmul.f32 %v95, 0.17677669
    %v100 = vmul.f32 %v97, 0.17677669
    %v101 = vadd.f32 %v99, %v36
    %v102 = vadd.f32 %v100, %v37
    %vm103 = vcmask 130048
    %v104 = vsel %vm103, %v101, -inf
    %105 = vmax.xlane.f32.xlu0 %v104
    %v106 = vpop.xlane.xlu0 %105
    %v107 = vsel %vm103, %v102, -inf
    %108 = vmax.xlane.f32.xlu0 %v107
    %v109 = vpop.xlane.xlu0 %108
    %v110 = vsub.f32 %v101, %v106
    %v111 = vsub.f32 %v102, %v109
    %v112 = vmul.f32 %v110, 1.442695
    %v113 = vpow.pop %v112
    %v114 = vmul.f32 %v111, 1.442695
    %v115 = vpow.pop %v114
    %v116 = vsel %vm103, %v113, 0.0
    %117 = vadd.xlane.f32.xlu0 %v116
    %v118 = vpop.xlane.xlu0 %117
    %v119 = vsel %vm103, %v115, 0.0
    %120 = vadd.xlane.f32.xlu0 %v119
    %v121 = vpop.xlane.xlu0 %120
    %v122 = vrcp.pop %v118
    %v123 = vmul.f32 %v118, %v122
    %v124 = vsub.f32 1.0, %v123
    %v125 = vmul.f32 %v122, %v124
    %v126 = vadd.f32 %v122, %v125
    %vm127 = vweird.f32 %v118
    %vm128 = vweird.f32 %v122
    %vm129 = vmor %vm127, %vm128
    %v130 = vsel %vm129, %v122, %v126
    %v131 = vand.u32 2147483647, %v118
    %vm132 = vcmp.eq.f32.partialorder %v131, 8.507059e+37
    %v133 = vand.u32 %v118, 2147483648
    %v134 = vor.u32 1.1754944e-38, %v133
    %v135 = vsel %vm132, %v134, %v130
    %v136 = vmul.f32 %v113, %v135
    %v137 = vrcp.pop %v121
    %v138 = vmul.f32 %v121, %v137
    %v139 = vsub.f32 1.0, %v138
    %v140 = vmul.f32 %v137, %v139
    %v141 = vadd.f32 %v137, %v140
    %vm142 = vweird.f32 %v121
    %vm143 = vweird.f32 %v137
    %vm144 = vmor %vm142, %vm143
    %v145 = vsel %vm144, %v137, %v141
    %v146 = vand.u32 2147483647, %v121
    %vm147 = vcmp.eq.f32.partialorder %v146, 8.507059e+37
    %v148 = vand.u32 %v121, 2147483648
    %v149 = vor.u32 1.1754944e-38, %v148
    %v150 = vsel %vm147, %v149, %v145
    %v151 = vmul.f32 %v115, %v150
    %v152 = vpack.c.bf16 %v151, %v136
    %153 = vrot.lane.b32.xlu0 %v75, 64
    %v154 = vpop.permute.xlu0 %153
    %v157 = vsel %vm103, %v152, 0
    %159 = vmatpush.bf16.msra.mxu0 0
    %160 = vmatpush.bf16.msra.mxu0 0
    %161 = vmatpush.bf16.msra.mxu0 0
    %162 = vmatpush.bf16.msra.mxu0 0
    %163 = vmatpush.bf16.msra.mxu0 0
    %164 = vmatpush.bf16.msra.mxu0 0
    %165 = vmatpush.bf16.msra.mxu0 0
    %166 = vmatpush.bf16.msra.mxu0 %v154
    %167 = vmatmul.bf16.gmra.mxu0 %v157
    %v168 = vpop.f32.mrf.mxu0
    %v169 = vadd.f32 0.0, %v168
    %v170 = vpop.f32.mrf.mxu0
    %v171 = vadd.f32 0.0, %v170
    %172 = vdwg.mxu0
    %v173 = vpack.c.bf16 %v171, %v169
    %174 = vrot.lane.b32.xlu0 %v53, 32
    %v175 = vpop.permute.xlu0 %174
    %176 = vrot.lane.b32.xlu0 %v54, 32
    %v177 = vpop.permute.xlu0 %176
    %181 = vrot.lane.b32.xlu0 %v44, 32
    %v182 = vpop.permute.xlu0 %181
    %v185 = vsel %vm57, %v173, 0
    %187 = vmatpush.bf16.msra.mxu0 0
    %188 = vmatpush.bf16.msra.mxu0 0
    %189 = vmatpush.bf16.msra.mxu0 0
    %190 = vmatpush.bf16.msra.mxu0 0
    %191 = vmatpush.bf16.msra.mxu0 0
    %192 = vmatpush.bf16.msra.mxu0 0
    %193 = vmatpush.bf16.msra.mxu0 %v177
    %194 = vmatpush.bf16.msra.mxu0 %v175
    %195 = vmatmul.bf16.gmra.mxu0 %v185
    %v196 = vpop.f32.mrf.mxu0
    %v197 = vadd.f32 %v182, %v196
    %v198 = vpop.f32.mrf.mxu0
    %v199 = vadd.f32 %v182, %v198
    %200 = vdwg.mxu0
    %v201 = vadd.f32 %v34, %v197
    %v202 = vadd.f32 %v35, %v199
    %v203 = vsel %vm57, %v201, 0.0
    %204 = vadd.xlane.f32.xlu0 %v203
    %v205 = vpop.xlane.xlu0 %204
    %v206 = vsel %vm57, %v202, 0.0
    %207 = vadd.xlane.f32.xlu0 %v206
    %v208 = vpop.xlane.xlu0 %207
    %v209 = vrcp.pop 32.0
    %v210 = vmul.f32 32.0, %v209
    %v211 = vsub.f32 1.0, %v210
    %v212 = vmul.f32 %v209, %v211
    %v213 = vadd.f32 %v209, %v212
    %vm214 = vweird.f32 %v209
    %v215 = vsel %vm214, %v209, %v213
    %v216 = vmul.f32 %v205, %v215
    %v217 = vmul.f32 %v208, %v215
    %v218 = vsub.f32 %v201, %v216
    %v219 = vsub.f32 %v202, %v217
    %v220 = vmul.f32 %v218, %v218
    %v221 = vmul.f32 %v219, %v219
    %v222 = vsel %vm57, %v220, 0.0
    %223 = vadd.xlane.f32.xlu0 %v222
    %v224 = vpop.xlane.xlu0 %223
    %v225 = vsel %vm57, %v221, 0.0
    %226 = vadd.xlane.f32.xlu0 %v225
    %v227 = vpop.xlane.xlu0 %226
    %v228 = vmul.f32 %v224, %v215
    %v229 = vmul.f32 %v227, %v215
    %v230 = vadd.f32 %v228, 1e-12
    %v231 = vadd.f32 %v229, 1e-12
    %v232 = vrsqrt.pop %v230
    %v233 = vmul.f32 %v232, %v230
    %v234 = vmul.f32 %v233, %v232
    %v235 = vmul.f32 0.5, %v234
    %v236 = vsub.f32 1.5, %v235
    %v237 = vmul.f32 %v232, %v236
    %vm238 = vweird.f32 %v230
    %vm239 = vweird.f32 %v232
    %vm240 = vmor %vm238, %vm239
    %v241 = vsel %vm240, %v232, %v237
    %v242 = vrsqrt.pop %v231
    %v243 = vmul.f32 %v242, %v231
    %v244 = vmul.f32 %v243, %v242
    %v245 = vmul.f32 0.5, %v244
    %v246 = vsub.f32 1.5, %v245
    %v247 = vmul.f32 %v242, %v246
    %vm248 = vweird.f32 %v231
    %vm249 = vweird.f32 %v242
    %vm250 = vmor %vm248, %vm249
    %v251 = vsel %vm250, %v242, %v247
    %v252 = vmul.f32 %v218, %v241
    %v253 = vmul.f32 %v219, %v251
    %v254 = vperm.slane %v42, 1
    %v255 = vmul.f32 %v252, %v254
    %v256 = vmul.f32 %v253, %v254
    %258 = vrot.lane.b32.xlu0 %v254, 96
    %v259 = vpop.permute.xlu0 %258
    %v261 = vadd.f32 %v255, %v259
    %v262 = vadd.f32 %v256, %v259
    %v263 = vpack.c.bf16 %v262, %v261
    %v264 = vld [vmem:[%s4] sm:$0xf]
    %v265 = vld [vmem:[%s4 + $0x4] sm:$0xf]
    %v266 = vld [vmem:[%s4 + $0x8] sm:$0xf]
    %v267 = vld [vmem:[%s4 + $0xc] sm:$0xf]
    %v272 = vunpack.c.l.b16 %v264
    %v273 = vunpack.c.l.b16 %v265
    %v274 = vunpack.c.l.b16 %v266
    %v275 = vunpack.c.l.b16 %v267
    %v276 = vpack.c.b16 %v273, %v272
    %v277 = vpack.c.b16 %v275, %v274
    %280 = vrot.lane.b32.xlu0 %v254, 64
    %v281 = vpop.permute.xlu0 %280
    %v284 = vsel %vm57, %v263, 0
    %286 = vmatpush.bf16.msra.mxu0 0
    %287 = vmatpush.bf16.msra.mxu0 0
    %288 = vmatpush.bf16.msra.mxu0 0
    %289 = vmatpush.bf16.msra.mxu0 0
    %290 = vmatpush.bf16.msra.mxu0 0
    %291 = vmatpush.bf16.msra.mxu0 0
    %292 = vmatpush.bf16.msra.mxu0 %v277
    %293 = vmatpush.bf16.msra.mxu0 %v276
    %294 = vmatmul.bf16.gmra.mxu0 %v284
    %v295 = vpop.f32.mrf.mxu0
    %v296 = vadd.f32 %v281, %v295
    %v297 = vpop.f32.mrf.mxu0
    %v298 = vadd.f32 %v281, %v297
    %299 = vdwg.mxu0
    %v300 = vmul.f32 %v296, %v296
    %v301 = vmul.f32 %v298, %v298
    %v302 = vmul.f32 %v296, %v300
    %v303 = vmul.f32 %v298, %v301
    %v304 = vmul.f32 %v302, 0.044715
    %v305 = vmul.f32 %v303, 0.044715
    %v306 = vadd.f32 %v296, %v304
    %v307 = vadd.f32 %v298, %v305
    %v308 = vmul.f32 %v306, 0.7978846
    %v309 = vmul.f32 %v307, 0.7978846
    %v310 = vtanh.pop %v308
    %v311 = vtanh.pop %v309
    %v312 = vadd.f32 %v310, 1.0
    %v313 = vadd.f32 %v311, 1.0
    %v314 = vmul.f32 %v312, 0.5
    %v315 = vmul.f32 %v313, 0.5
    %v316 = vmul.f32 %v296, %v314
    %v317 = vmul.f32 %v298, %v315
    %v318 = vpack.c.bf16 %v317, %v316
    %v319 = vld [vmem:[%s5] sm:$0xf]
    %v320 = vld [vmem:[%s5 + $0x4] sm:$0xf]
    %v321 = vld [vmem:[%s5 + $0x8] sm:$0xf]
    %v322 = vld [vmem:[%s5 + $0xc] sm:$0xf]
    %v323 = vld [vmem:[%s5 + $0x10] sm:$0xf]
    %v324 = vld [vmem:[%s5 + $0x14] sm:$0xf]
    %v325 = vld [vmem:[%s5 + $0x18] sm:$0xf]
    %v326 = vld [vmem:[%s5 + $0x1c] sm:$0xf]
    %v327 = vperm.slane %v42, 2
    %v336 = vunpack.c.l.b16 %v319
    %v337 = vunpack.c.l.b16 %v320
    %v338 = vunpack.c.l.b16 %v321
    %v339 = vunpack.c.l.b16 %v322
    %v340 = vunpack.c.l.b16 %v323
    %v341 = vunpack.c.l.b16 %v324
    %v342 = vunpack.c.l.b16 %v325
    %v343 = vunpack.c.l.b16 %v326
    %v344 = vpack.c.b16 %v337, %v336
    %v345 = vpack.c.b16 %v339, %v338
    %v346 = vpack.c.b16 %v341, %v340
    %v347 = vpack.c.b16 %v343, %v342
    %vm352 = vcmask 523264
    %v354 = vsel %vm352, %v318, 0
    %356 = vmatpush.bf16.msra.mxu0 0
    %357 = vmatpush.bf16.msra.mxu0 0
    %358 = vmatpush.bf16.msra.mxu0 0
    %359 = vmatpush.bf16.msra.mxu0 0
    %360 = vmatpush.bf16.msra.mxu0 %v347
    %361 = vmatpush.bf16.msra.mxu0 %v346
    %362 = vmatpush.bf16.msra.mxu0 %v345
    %363 = vmatpush.bf16.msra.mxu0 %v344
    %364 = vmatmul.bf16.gmra.mxu0 %v354
    %v365 = vpop.f32.mrf.mxu0
    %v366 = vadd.f32 %v327, %v365
    %v367 = vpop.f32.mrf.mxu0
    %v368 = vadd.f32 %v327, %v367
    %369 = vdwg.mxu0
    %v370 = vadd.f32 %v261, %v366
    %v371 = vadd.f32 %v262, %v368
    %v372 = vsel %vm57, %v370, 0.0
    %373 = vadd.xlane.f32.xlu0 %v372
    %v374 = vpop.xlane.xlu0 %373
    %v375 = vsel %vm57, %v371, 0.0
    %376 = vadd.xlane.f32.xlu0 %v375
    %v377 = vpop.xlane.xlu0 %376
    %v378 = vmul.f32 %v374, %v215
    %v379 = vmul.f32 %v377, %v215
    %v380 = vsub.f32 %v370, %v378
    %v381 = vsub.f32 %v371, %v379
    %v382 = vmul.f32 %v380, %v380
    %v383 = vmul.f32 %v381, %v381
    %v384 = vsel %vm57, %v382, 0.0
    %385 = vadd.xlane.f32.xlu0 %v384
    %v386 = vpop.xlane.xlu0 %385
    %v387 = vsel %vm57, %v383, 0.0
    %388 = vadd.xlane.f32.xlu0 %v387
    %v389 = vpop.xlane.xlu0 %388
    %v390 = vmul.f32 %v386, %v215
    %v391 = vmul.f32 %v389, %v215
    %v392 = vadd.f32 %v390, 1e-12
    %v393 = vadd.f32 %v391, 1e-12
    %v394 = vrsqrt.pop %v392
    %v395 = vmul.f32 %v394, %v392
    %v396 = vmul.f32 %v395, %v394
    %v397 = vmul.f32 0.5, %v396
    %v398 = vsub.f32 1.5, %v397
    %v399 = vmul.f32 %v394, %v398
    %vm400 = vweird.f32 %v392
    %vm401 = vweird.f32 %v394
    %vm402 = vmor %vm400, %vm401
    %v403 = vsel %vm402, %v394, %v399
    %v404 = vrsqrt.pop %v393
    %v405 = vmul.f32 %v404, %v393
    %v406 = vmul.f32 %v405, %v404
    %v407 = vmul.f32 0.5, %v406
    %v408 = vsub.f32 1.5, %v407
    %v409 = vmul.f32 %v404, %v408
    %vm410 = vweird.f32 %v393
    %vm411 = vweird.f32 %v404
    %vm412 = vmor %vm410, %vm411
    %v413 = vsel %vm412, %v404, %v409
    %v414 = vmul.f32 %v380, %v403
    %v415 = vmul.f32 %v381, %v413
    %417 = vrot.lane.b32.xlu0 %v327, 96
    %v418 = vpop.permute.xlu0 %417
    %v420 = vmul.f32 %v414, %v418
    %v421 = vmul.f32 %v415, %v418
    %422 = vrot.lane.b32.xlu0 %v327, 64
    %v423 = vpop.permute.xlu0 %422
    %v425 = vadd.f32 %v420, %v423
    %v426 = vadd.f32 %v421, %v423
    %s427 = scalar_lea.vmem %s3, 16
    %v428 = vld [vmem:[%s427] sm:$0xf]
    %v429 = vld [vmem:[%s427 + $0x4] sm:$0xf]
    %v430 = vld [vmem:[%s427 + $0x8] sm:$0xf]
    %v431 = vld [vmem:[%s427 + $0xc] sm:$0xf]
    %s432 = scalar_lea.vmem %s6, 4
    %v433 = vld [vmem:[%s432] sm:$0x7]
    %v434 = vpack.c.bf16 %v426, %v425
    %v435 = vperm.slane %v433, 0
    %v440 = vunpack.c.l.b16 %v428
    %v441 = vunpack.c.l.b16 %v429
    %v442 = vunpack.c.l.b16 %v430
    %v443 = vunpack.c.l.b16 %v431
    %v444 = vpack.c.b16 %v441, %v440
    %v445 = vpack.c.b16 %v443, %v442
    %v449 = vsel %vm57, %v434, 0
    %451 = vmatpush.bf16.msra.mxu0 0
    %452 = vmatpush.bf16.msra.mxu0 0
    %453 = vmatpush.bf16.msra.mxu0 0
    %454 = vmatpush.bf16.msra.mxu0 0
    %455 = vmatpush.bf16.msra.mxu0 0
    %456 = vmatpush.bf16.msra.mxu0 0
    %457 = vmatpush.bf16.msra.mxu0 %v445
    %458 = vmatpush.bf16.msra.mxu0 %v444
    %459 = vmatmul.bf16.gmra.mxu0 %v449
    %v460 = vpop.f32.mrf.mxu0
    %v461 = vadd.f32 %v435, %v460
    %v462 = vpop.f32.mrf.mxu0
    %v463 = vadd.f32 %v435, %v462
    %464 = vdwg.mxu0
    %v465 = vpack.c.bf16 %v463, %v461
    %467 = vrot.lane.b32.xlu0 %v465, 96
    %v468 = vpop.permute.xlu0 %467
    %v470 = vsel %vm57, %v465, 0
    %v473 = vsel %vm57, %v468, 0
    %475 = vmatpush.bf16.xpose.msra.mxu0 0
    %476 = vmatpush.bf16.xpose.msra.mxu0 0
    %477 = vmatpush.bf16.xpose.msra.mxu0 0
    %478 = vmatpush.bf16.xpose.msra.mxu0 0
    %479 = vmatpush.bf16.xpose.msra.mxu0 0
    %480 = vmatpush.bf16.xpose.msra.mxu0 0
    %481 = vmatpush.bf16.xpose.msra.mxu0 0
    %482 = vmatpush.bf16.xpose.msra.mxu0 %v473
    %483 = vmatmul.bf16.gmra.mxu0 %v470
    %v484 = vpop.f32.mrf.mxu0
    %v485 = vadd.f32 0.0, %v484
    %v486 = vpop.f32.mrf.mxu0
    %v487 = vadd.f32 0.0, %v486
    %488 = vdwg.mxu0
    %v489 = vmul.f32 %v485, 0.17677669
    %v490 = vmul.f32 %v487, 0.17677669
    %v491 = vadd.f32 %v489, %v36
    %v492 = vadd.f32 %v490, %v37
    %v493 = vsel %vm103, %v491, -inf
    %494 = vmax.xlane.f32.xlu0 %v493
    %v495 = vpop.xlane.xlu0 %494
    %v496 = vsel %vm103, %v492, -inf
    %497 = vmax.xlane.f32.xlu0 %v496
    %v498 = vpop.xlane.xlu0 %497
    %v499 = vsub.f32 %v491, %v495
    %v500 = vsub.f32 %v492, %v498
    %v501 = vmul.f32 %v499, 1.442695
    %v502 = vpow.pop %v501
    %v503 = vmul.f32 %v500, 1.442695
    %v504 = vpow.pop %v503
    %v505 = vsel %vm103, %v502, 0.0
    %506 = vadd.xlane.f32.xlu0 %v505
    %v507 = vpop.xlane.xlu0 %506
    %v508 = vsel %vm103, %v504, 0.0
    %509 = vadd.xlane.f32.xlu0 %v508
    %v510 = vpop.xlane.xlu0 %509
    %v511 = vrcp.pop %v507
    %v512 = vmul.f32 %v507, %v511
    %v513 = vsub.f32 1.0, %v512
    %v514 = vmul.f32 %v511, %v513
    %v515 = vadd.f32 %v511, %v514
    %vm516 = vweird.f32 %v507
    %vm517 = vweird.f32 %v511
    %vm518 = vmor %vm516, %vm517
    %v519 = vsel %vm518, %v511, %v515
    %v520 = vand.u32 2147483647, %v507
    %vm521 = vcmp.eq.f32.partialorder %v520, 8.507059e+37
    %v522 = vand.u32 %v507, 2147483648
    %v523 = vor.u32 1.1754944e-38, %v522
    %v524 = vsel %vm521, %v523, %v519
    %v525 = vmul.f32 %v502, %v524
    %v526 = vrcp.pop %v510
    %v527 = vmul.f32 %v510, %v526
    %v528 = vsub.f32 1.0, %v527
    %v529 = vmul.f32 %v526, %v528
    %v530 = vadd.f32 %v526, %v529
    %vm531 = vweird.f32 %v510
    %vm532 = vweird.f32 %v526
    %vm533 = vmor %vm531, %vm532
    %v534 = vsel %vm533, %v526, %v530
    %v535 = vand.u32 2147483647, %v510
    %vm536 = vcmp.eq.f32.partialorder %v535, 8.507059e+37
    %v537 = vand.u32 %v510, 2147483648
    %v538 = vor.u32 1.1754944e-38, %v537
    %v539 = vsel %vm536, %v538, %v534
    %v540 = vmul.f32 %v504, %v539
    %v541 = vpack.c.bf16 %v540, %v525
    %542 = vrot.lane.b32.xlu0 %v465, 64
    %v543 = vpop.permute.xlu0 %542
    %v546 = vsel %vm103, %v541, 0
    %548 = vmatpush.bf16.msra.mxu0 0
    %549 = vmatpush.bf16.msra.mxu0 0
    %550 = vmatpush.bf16.msra.mxu0 0
    %551 = vmatpush.bf16.msra.mxu0 0
    %552 = vmatpush.bf16.msra.mxu0 0
    %553 = vmatpush.bf16.msra.mxu0 0
    %554 = vmatpush.bf16.msra.mxu0 0
    %555 = vmatpush.bf16.msra.mxu0 %v543
    %556 = vmatmul.bf16.gmra.mxu0 %v546
    %v557 = vpop.f32.mrf.mxu0
    %v558 = vadd.f32 0.0, %v557
    %v559 = vpop.f32.mrf.mxu0
    %v560 = vadd.f32 0.0, %v559
    %561 = vdwg.mxu0
    %v562 = vpack.c.bf16 %v560, %v558
    %563 = vrot.lane.b32.xlu0 %v444, 32
    %v564 = vpop.permute.xlu0 %563
    %565 = vrot.lane.b32.xlu0 %v445, 32
    %v566 = vpop.permute.xlu0 %565
    %570 = vrot.lane.b32.xlu0 %v435, 32
    %v571 = vpop.permute.xlu0 %570
    %v574 = vsel %vm57, %v562, 0
    %576 = vmatpush.bf16.msra.mxu0 0
    %577 = vmatpush.bf16.msra.mxu0 0
    %578 = vmatpush.bf16.msra.mxu0 0
    %579 = vmatpush.bf16.msra.mxu0 0
    %580 = vmatpush.bf16.msra.mxu0 0
    %581 = vmatpush.bf16.msra.mxu0 0
    %582 = vmatpush.bf16.msra.mxu0 %v566
    %583 = vmatpush.bf16.msra.mxu0 %v564
    %584 = vmatmul.bf16.gmra.mxu0 %v574
    %v585 = vpop.f32.mrf.mxu0
    %v586 = vadd.f32 %v571, %v585
    %v587 = vpop.f32.mrf.mxu0
    %v588 = vadd.f32 %v571, %v587
    %589 = vdwg.mxu0
    %v590 = vadd.f32 %v425, %v586
    %v591 = vadd.f32 %v426, %v588
    %v592 = vsel %vm57, %v590, 0.0
    %593 = vadd.xlane.f32.xlu0 %v592
    %v594 = vpop.xlane.xlu0 %593
    %v595 = vsel %vm57, %v591, 0.0
    %596 = vadd.xlane.f32.xlu0 %v595
    %v597 = vpop.xlane.xlu0 %596
    %v598 = vmul.f32 %v594, %v215
    %v599 = vmul.f32 %v597, %v215
    %v600 = vsub.f32 %v590, %v598
    %v601 = vsub.f32 %v591, %v599
    %v602 = vmul.f32 %v600, %v600
    %v603 = vmul.f32 %v601, %v601
    %v604 = vsel %vm57, %v602, 0.0
    %605 = vadd.xlane.f32.xlu0 %v604
    %v606 = vpop.xlane.xlu0 %605
    %v607 = vsel %vm57, %v603, 0.0
    %608 = vadd.xlane.f32.xlu0 %v607
    %v609 = vpop.xlane.xlu0 %608
    %v610 = vmul.f32 %v606, %v215
    %v611 = vmul.f32 %v609, %v215
    %v612 = vadd.f32 %v610, 1e-12
    %v613 = vadd.f32 %v611, 1e-12
    %v614 = vrsqrt.pop %v612
    %v615 = vmul.f32 %v614, %v612
    %v616 = vmul.f32 %v615, %v614
    %v617 = vmul.f32 0.5, %v616
    %v618 = vsub.f32 1.5, %v617
    %v619 = vmul.f32 %v614, %v618
    %vm620 = vweird.f32 %v612
    %vm621 = vweird.f32 %v614
    %vm622 = vmor %vm620, %vm621
    %v623 = vsel %vm622, %v614, %v619
    %v624 = vrsqrt.pop %v613
    %v625 = vmul.f32 %v624, %v613
    %v626 = vmul.f32 %v625, %v624
    %v627 = vmul.f32 0.5, %v626
    %v628 = vsub.f32 1.5, %v627
    %v629 = vmul.f32 %v624, %v628
    %vm630 = vweird.f32 %v613
    %vm631 = vweird.f32 %v624
    %vm632 = vmor %vm630, %vm631
    %v633 = vsel %vm632, %v624, %v629
    %v634 = vmul.f32 %v600, %v623
    %v635 = vmul.f32 %v601, %v633
    %v636 = vperm.slane %v433, 1
    %v637 = vmul.f32 %v634, %v636
    %v638 = vmul.f32 %v635, %v636
    %640 = vrot.lane.b32.xlu0 %v636, 96
    %v641 = vpop.permute.xlu0 %640
    %v643 = vadd.f32 %v637, %v641
    %v644 = vadd.f32 %v638, %v641
    %v645 = vpack.c.bf16 %v644, %v643
    %s646 = scalar_lea.vmem %s4, 16
    %v647 = vld [vmem:[%s646] sm:$0xf]
    %v648 = vld [vmem:[%s646 + $0x4] sm:$0xf]
    %v649 = vld [vmem:[%s646 + $0x8] sm:$0xf]
    %v650 = vld [vmem:[%s646 + $0xc] sm:$0xf]
    %v655 = vunpack.c.l.b16 %v647
    %v656 = vunpack.c.l.b16 %v648
    %v657 = vunpack.c.l.b16 %v649
    %v658 = vunpack.c.l.b16 %v650
    %v659 = vpack.c.b16 %v656, %v655
    %v660 = vpack.c.b16 %v658, %v657
    %663 = vrot.lane.b32.xlu0 %v636, 64
    %v664 = vpop.permute.xlu0 %663
    %v667 = vsel %vm57, %v645, 0
    %669 = vmatpush.bf16.msra.mxu0 0
    %670 = vmatpush.bf16.msra.mxu0 0
    %671 = vmatpush.bf16.msra.mxu0 0
    %672 = vmatpush.bf16.msra.mxu0 0
    %673 = vmatpush.bf16.msra.mxu0 0
    %674 = vmatpush.bf16.msra.mxu0 0
    %675 = vmatpush.bf16.msra.mxu0 %v660
    %676 = vmatpush.bf16.msra.mxu0 %v659
    %677 = vmatmul.bf16.gmra.mxu0 %v667
    %v678 = vpop.f32.mrf.mxu0
    %v679 = vadd.f32 %v664, %v678
    %v680 = vpop.f32.mrf.mxu0
    %v681 = vadd.f32 %v664, %v680
    %682 = vdwg.mxu0
    %v683 = vmul.f32 %v679, %v679
    %v684 = vmul.f32 %v681, %v681
    %v685 = vmul.f32 %v679, %v683
    %v686 = vmul.f32 %v681, %v684
    %v687 = vmul.f32 %v685, 0.044715
    %v688 = vmul.f32 %v686, 0.044715
    %v689 = vadd.f32 %v679, %v687
    %v690 = vadd.f32 %v681, %v688
    %v691 = vmul.f32 %v689, 0.7978846
    %v692 = vmul.f32 %v690, 0.7978846
    %v693 = vtanh.pop %v691
    %v694 = vtanh.pop %v692
    %v695 = vadd.f32 %v693, 1.0
    %v696 = vadd.f32 %v694, 1.0
    %v697 = vmul.f32 %v695, 0.5
    %v698 = vmul.f32 %v696, 0.5
    %v699 = vmul.f32 %v679, %v697
    %v700 = vmul.f32 %v681, %v698
    %v701 = vpack.c.bf16 %v700, %v699
    %s702 = scalar_lea.vmem %s5, 32
    %v703 = vld [vmem:[%s702] sm:$0xf]
    %v704 = vld [vmem:[%s702 + $0x4] sm:$0xf]
    %v705 = vld [vmem:[%s702 + $0x8] sm:$0xf]
    %v706 = vld [vmem:[%s702 + $0xc] sm:$0xf]
    %v707 = vld [vmem:[%s702 + $0x10] sm:$0xf]
    %v708 = vld [vmem:[%s702 + $0x14] sm:$0xf]
    %v709 = vld [vmem:[%s702 + $0x18] sm:$0xf]
    %v710 = vld [vmem:[%s702 + $0x1c] sm:$0xf]
    %v711 = vperm.slane %v433, 2
    %v720 = vunpack.c.l.b16 %v703
    %v721 = vunpack.c.l.b16 %v704
    %v722 = vunpack.c.l.b16 %v705
    %v723 = vunpack.c.l.b16 %v706
    %v724 = vunpack.c.l.b16 %v707
    %v725 = vunpack.c.l.b16 %v708
    %v726 = vunpack.c.l.b16 %v709
    %v727 = vunpack.c.l.b16 %v710
    %v728 = vpack.c.b16 %v721, %v720
    %v729 = vpack.c.b16 %v723, %v722
    %v730 = vpack.c.b16 %v725, %v724
    %v731 = vpack.c.b16 %v727, %v726
    %v737 = vsel %vm352, %v701, 0
    %739 = vmatpush.bf16.msra.mxu0 0
    %740 = vmatpush.bf16.msra.mxu0 0
    %741 = vmatpush.bf16.msra.mxu0 0
    %742 = vmatpush.bf16.msra.mxu0 0
    %743 = vmatpush.bf16.msra.mxu0 %v731
    %744 = vmatpush.bf16.msra.mxu0 %v730
    %745 = vmatpush.bf16.msra.mxu0 %v729
    %746 = vmatpush.bf16.msra.mxu0 %v728
    %747 = vmatmul.bf16.gmra.mxu0 %v737
    %v748 = vpop.f32.mrf.mxu0
    %v749 = vadd.f32 %v711, %v748
    %v750 = vpop.f32.mrf.mxu0
    %v751 = vadd.f32 %v711, %v750
    %752 = vdwg.mxu0
    %v753 = vadd.f32 %v643, %v749
    %v754 = vadd.f32 %v644, %v751
    %v755 = vsel %vm57, %v753, 0.0
    %756 = vadd.xlane.f32.xlu0 %v755
    %v757 = vpop.xlane.xlu0 %756
    %v758 = vsel %vm57, %v754, 0.0
    %759 = vadd.xlane.f32.xlu0 %v758
    %v760 = vpop.xlane.xlu0 %759
    %v761 = vmul.f32 %v757, %v215
    %v762 = vmul.f32 %v760, %v215
    %v763 = vsub.f32 %v753, %v761
    %v764 = vsub.f32 %v754, %v762
    %v765 = vmul.f32 %v763, %v763
    %v766 = vmul.f32 %v764, %v764
    %v767 = vsel %vm57, %v765, 0.0
    %768 = vadd.xlane.f32.xlu0 %v767
    %v769 = vpop.xlane.xlu0 %768
    %v770 = vsel %vm57, %v766, 0.0
    %771 = vadd.xlane.f32.xlu0 %v770
    %v772 = vpop.xlane.xlu0 %771
    %v773 = vmul.f32 %v769, %v215
    %v774 = vmul.f32 %v772, %v215
    %v775 = vadd.f32 %v773, 1e-12
    %v776 = vadd.f32 %v774, 1e-12
    %v777 = vrsqrt.pop %v775
    %v778 = vmul.f32 %v777, %v775
    %v779 = vmul.f32 %v778, %v777
    %v780 = vmul.f32 0.5, %v779
    %v781 = vsub.f32 1.5, %v780
    %v782 = vmul.f32 %v777, %v781
    %vm783 = vweird.f32 %v775
    %vm784 = vweird.f32 %v777
    %vm785 = vmor %vm783, %vm784
    %v786 = vsel %vm785, %v777, %v782
    %v787 = vrsqrt.pop %v776
    %v788 = vmul.f32 %v787, %v776
    %v789 = vmul.f32 %v788, %v787
    %v790 = vmul.f32 0.5, %v789
    %v791 = vsub.f32 1.5, %v790
    %v792 = vmul.f32 %v787, %v791
    %vm793 = vweird.f32 %v776
    %vm794 = vweird.f32 %v787
    %vm795 = vmor %vm793, %vm794
    %v796 = vsel %vm795, %v787, %v792
    %v797 = vmul.f32 %v763, %v786
    %v798 = vmul.f32 %v764, %v796
    %800 = vrot.lane.b32.xlu0 %v711, 96
    %v801 = vpop.permute.xlu0 %800
    %v803 = vmul.f32 %v797, %v801
    %v804 = vmul.f32 %v798, %v801
    %805 = vrot.lane.b32.xlu0 %v711, 64
    %v806 = vpop.permute.xlu0 %805
    %v808 = vadd.f32 %v803, %v806
    %v809 = vadd.f32 %v804, %v806
    %v810 = vld [vmem:[%s2] sm:$0xf]
    %v812 = vsel %vm103, %v810, 0
    %814 = vmatpush.msra.mxu0 0.0
    %815 = vmatpush.msra.mxu0 0.0
    %816 = vmatpush.msra.mxu0 0.0
    %817 = vmatpush.msra.mxu0 0.0
    %818 = vmatpush.msra.mxu0 0.0
    %819 = vmatpush.msra.mxu0 0.0
    %820 = vmatpush.msra.mxu0 0.0
    %821 = vmatpush.msra.mxu0 0.0
    %822 = vmatpush.msra.mxu0 0.0
    %823 = vmatpush.msra.mxu0 0.0
    %824 = vmatpush.msra.mxu0 0.0
    %825 = vmatpush.msra.mxu0 0.0
    %826 = vmatpush.msra.mxu0 0.0
    %827 = vmatpush.msra.mxu0 0.0
    %828 = vmatpush.msra.mxu0 %v809
    %829 = vmatpush.msra.mxu0 %v808
    %830 = vmatmul.f32.gmra.mxu0 %v812
    %v831 = vpop.f32.mrf.mxu0
    %v832 = vadd.f32 0.0, %v831
    %833 = vdwg.mxu0
    %v834 = vpack.c.bf16 %v832, %v832
    %v835 = vld [vmem:[%s7] sm:$0xf]
    %v836 = vld [vmem:[%s7 + $0x4] sm:$0xf]
    %v837 = vld [vmem:[%s7 + $0x8] sm:$0xf]
    %v838 = vld [vmem:[%s7 + $0xc] sm:$0xf]
    %v839 = vld [vmem:[%s8] sm:$0x1]
    %v841 = vperm.slane %v839, 0
    %v844 = vrot.slane %v834, 1
    %v849 = vunpack.c.l.b16 %v835
    %v850 = vunpack.c.l.b16 %v836
    %v851 = vunpack.c.l.b16 %v837
    %v852 = vunpack.c.l.b16 %v838
    %v853 = vpack.c.b16 %v850, %v849
    %v854 = vpack.c.b16 %v852, %v851
    %v858 = vsel %vm57, %v844, 0
    %860 = vmatpush.bf16.msra.mxu0 0
    %861 = vmatpush.bf16.msra.mxu0 0
    %862 = vmatpush.bf16.msra.mxu0 0
    %863 = vmatpush.bf16.msra.mxu0 0
    %864 = vmatpush.bf16.msra.mxu0 0
    %865 = vmatpush.bf16.msra.mxu0 0
    %866 = vmatpush.bf16.msra.mxu0 %v854
    %867 = vmatpush.bf16.msra.mxu0 %v853
    %868 = vmatmul.bf16.gmra.mxu0 %v858
    %v869 = vpop.f32.mrf.mxu0
    %v870 = vadd.f32 %v841, %v869
    %v871 = vpop.f32.mrf.mxu0
    %872 = vdwg.mxu0
    %v873 = vtanh.pop %v870
    %v875 = vrot.slane %v832, 2
    %876 = vrot.lane.b32.xlu0 %v875, 32
    %v877 = vpop.permute.xlu0 %876
    %880 = vrot.lane.b32.xlu0 %v873, 64
    %v881 = vpop.permute.xlu0 %880
    %v883 = vsel %vm57, %v832, %v877
    %v884 = vsel %vm352, %v883, %v881
    %vm885 = vcmask 785408
    %v886 = vsel %vm885, %v884, 0.0
    %887 = vst [vmem:[#allocation2] sm:$0x3] %v886
    // Predicated region
    $region38: #{query_encoder_forward.1} parent=1 // pred_check
      _
    $region39: #{query_encoder_forward.1} parent=1 // pred_check_branch
      %889 = sbr.rel (0) target = $region41
    $region40: #{query_encoder_forward.1} parent=1 // pred_region
      %891 = vsyncadd [#allocation3], 0
      %s893 = sshll.u32 [#allocation2], 4
      %s894 = int_to_ptr.vmem [resolvable:$true] %s893
      %s895 = sshll.u32 %s9, 4
      %s896 = int_to_ptr.hbm [resolvable:$true] %s895
      %898 = dma.vmem_to_hbm [thread:$0]  %s894, 32, %s896, [#allocation3]
    $region41: #{query_encoder_forward.1} parent=1 // pred_fallthru
      _
    // Predicated region
    $region42: #{query_encoder_forward.1} parent=1 // pred_check
      _
    $region43: #{query_encoder_forward.1} parent=1 // pred_check_branch
      %900 = sbr.rel (0) target = $region45
    $region44: #{query_encoder_forward.1} parent=1 // pred_region
      %902 = dma.done [#allocation3], 32
    $region45: #{query_encoder_forward.1} parent=1 // pred_fallthru
      _
    %903 = vsyncpa [#allocation3], 1

</llo_original>
